<compile_context>
chip_gen: v6e
topology: v6e:2x2x1
jax: 0.10.0
libtpu: 0.0.40
codegen_flags: <defaults>
</compile_context>

<pallas_src>
import functools
import math

import jax
import jax.numpy as jnp
from jax.experimental import pallas as pl
from jax.experimental.pallas import tpu as pltpu

_LANE = 128     # lane width (last dim)
_SUBLANE = 8    # f32 sublane count (second-to-last dim)


def _round_up(n, m):
    return ((n + m - 1) // m) * m


# ----------------------------- Pallas kernel ---------------------------------
def _mlp_fused_kernel(x_ref, *refs, n_linear: int, n_hidden_layers: int):
    """refs = (w0, b0, w1, b1, ..., w_{L-1}, b_{L-1}, o_ref).

    One batch tile of x per grid step; all weights/biases VMEM-resident for the whole
    grid.  MXU matmuls accumulate in f32; bias + ReLU epilogue stays in f32
    (v5e-friendly); activations are cast to the weight dtype only right before each
    matmul (no-op in the f32 path).
    """
    o_ref = refs[-1]
    wb = refs[:-1]

    h = x_ref[...]                       # already compute_dtype from the wrapper
    for i in range(n_linear):
        w = wb[2 * i][...]
        b = wb[2 * i + 1][...]           # f32 bias, (1, fout_p) -> broadcasts
        lhs = h if h.dtype == w.dtype else h.astype(w.dtype)
        y = jnp.dot(lhs, w, preferred_element_type=jnp.float32) + b
        if 1 <= i <= n_hidden_layers:    # torch Sequential: ReLU only after hidden Linears
            y = jnp.maximum(y, 0.0)
        h = y
    o_ref[...] = h.astype(o_ref.dtype)


# ----------------------------- One-time parameter prep ------------------------
def prepare_mlp_params(params, compute_dtype=jnp.float32):
    """Zero-pad every Linear to lane-dense (128-multiple) shapes, cast weights to
    compute_dtype (biases stay f32 for the f32 epilogue).  Call ONCE, not per step.

    Padding is exact: padded input columns are 0 and padded weight rows/cols are 0,
    so the padded computation equals the unpadded one on the real rows/cols.
    """
    compute_dtype = jnp.dtype(compute_dtype)
    flat = []
    in_p = None
    for (w, b) in params:
        fin, fout = w.shape
        fin_p, fout_p = _round_up(fin, _LANE), _round_up(fout, _LANE)
        if in_p is not None:
            assert fin_p == in_p, "layer input dim mismatch after padding"
        w_p = (jnp.zeros((fin_p, fout_p), jnp.float32)
               .at[:fin, :fout].set(w.astype(jnp.float32))
               .astype(compute_dtype))
        b_p = (jnp.zeros((1, fout_p), jnp.float32)
               .at[:, :fout].set(b.reshape(1, -1).astype(jnp.float32)))
        flat += [w_p, b_p]
        in_p = fout_p
    meta = dict(
        n_linear=len(params),
        feat_pad=_round_up(params[0][0].shape[0], _LANE),
        out_pad=in_p,
        out_features=params[-1][0].shape[1],
        compute_dtype=compute_dtype,
    )
    return tuple(flat), meta


# ----------------------------- Forward ----------------------------------------
def _mlp_forward_impl(x, flat_params, *, n_linear, n_hidden_layers, feat_pad,
                      out_pad, out_features, compute_dtype, tm_max):
    B, F = x.shape
    assert F <= feat_pad

    # Batch tile: multiple of 8 sublanes, capped so one tile stays VMEM/vreg friendly.
    tm = min(_round_up(B, _SUBLANE), tm_max)
    Bp = _round_up(B, tm)

    # Pad batch + features; in the bf16 path x is cast here (halves input DMA bytes).
    x_p = (jnp.zeros((Bp, feat_pad), compute_dtype)
           .at[:B, :F].set(x.astype(compute_dtype)))

    grid = (Bp // tm,)
    in_specs = [pl.BlockSpec((tm, feat_pad), lambda i: (i, 0))]      # blocked along M
    for p in flat_params:
        in_specs.append(pl.BlockSpec(p.shape, lambda i: (0, 0)))     # pinned (VMEM-resident)
    out_specs = pl.BlockSpec((tm, out_pad), lambda i: (i, 0))        # lane-dense slab

    # Explicit scoped-VMEM budget: double-buffered x/out tiles + weights/biases + headroom.
    def nbytes(shape, dt):
        return math.prod(shape) * jnp.dtype(dt).itemsize
    footprint = 2 * nbytes((tm, feat_pad), compute_dtype)
    footprint += 2 * nbytes((tm, out_pad), jnp.float32)
    for p in flat_params:
        footprint += 2 * p.size * jnp.dtype(p.dtype).itemsize
    vmem_limit = min(max(int(footprint * 1.5) + (1 << 20), 4 << 20), 64 << 20)

    kernel = functools.partial(_mlp_fused_kernel, n_linear=n_linear,
                               n_hidden_layers=n_hidden_layers)
    out_padded = pl.pallas_call(
        kernel,
        out_shape=jax.ShapeDtypeStruct((Bp, out_pad), jnp.float32),
        grid=grid,
        in_specs=in_specs,
        out_specs=out_specs,
        compiler_params=pltpu.CompilerParams(
            dimension_semantics=("parallel",),   # v7x: shard batch tiles across both TCs
            vmem_limit_bytes=vmem_limit,
        ),
    )(x_p, *flat_params)

    # Slice off batch padding and the lane padding of the final Linear(hidden, 1).
    return out_padded[:B, :out_features]


def make_mlp_forward(n_hidden_layers, meta, tm_max=256):
    """Build a jitted forward fn(x, flat_params) -> (B, 1) for prepared params."""
    fwd = functools.partial(_mlp_forward_impl, n_hidden_layers=n_hidden_layers,
                            tm_max=tm_max, **meta)
    return jax.jit(fwd)


# ----------------------------- Parameter init --------------------------------
def init_linear_params(key, in_features, out_features, dtype=jnp.float32):
    """Mirror torch.nn.Linear default init U(-1/sqrt(fan_in), 1/sqrt(fan_in))."""
    k_w, k_b = jax.random.split(key)
    bound = 1.0 / math.sqrt(in_features)
    # Stored as (in, out) so the kernel computes x @ W directly (PyTorch stores (out, in)).
    w = jax.random.uniform(k_w, (in_features, out_features), dtype, -bound, bound)
    b = jax.random.uniform(k_b, (1, out_features), dtype, -bound, bound)
    return w, b


def init_mlp_params(key, input_size, n_hidden_layers, hidden_size):
    params = []
    keys = jax.random.split(key, n_hidden_layers + 2)
    params.append(init_linear_params(keys[0], input_size, hidden_size))           # no act after
    for i in range(n_hidden_layers):
        params.append(init_linear_params(keys[1 + i], hidden_size, hidden_size))  # + ReLU
    params.append(init_linear_params(keys[-1], hidden_size, 1))                   # output head
    return params


# ----------------------------- Reference (pure JAX) ---------------------------
def mlp_forward_ref(x, params, n_hidden_layers):
    w, b = params[0]
    h = x @ w + b
    for i in range(n_hidden_layers):
        w, b = params[1 + i]
        h = jnp.maximum(h @ w + b, 0.0)
    w, b = params[-1]
    return h @ w + b


if __name__ == "__main__":
    # Small shapes consistent with the module's forward; batch big enough to exercise
    # the batch grid (2 tiles of 128 rows).
    batch = 256
    input_size = 32
    hidden_size = 32
    n_hidden_layers = 2   # activation_function = ReLU

    key = jax.random.PRNGKey(0)
    k_x, k_p = jax.random.split(key)
    x = jax.random.normal(k_x, (batch, input_size), dtype=jnp.float32)
    params = init_mlp_params(k_p, input_size, n_hidden_layers, hidden_size)

    # One-time prep (padding + casting hoisted out of the per-step forward).
    flat_params, meta = prepare_mlp_params(params, compute_dtype=jnp.float32)
    forward = make_mlp_forward(n_hidden_layers, meta, tm_max=128)

    out = forward(x, flat_params)
    out = jax.block_until_ready(out)

    ref = mlp_forward_ref(x, params, n_hidden_layers)
    assert out.shape == (batch, 1), out.shape
    assert jnp.allclose(out, ref, atol=1e-4, rtol=1e-4), "mismatch vs reference"

    print("KERNEL_OK")
</pallas_src>

<mosaic_0001>
module attributes {stable_mosaic.version = 11 : i64} {
  func.func @_mlp_fused_kernel(%arg0: i32, %arg1: memref<128x128xf32, #tpu.memory_space<vmem>>, %arg2: memref<128x128xf32, #tpu.memory_space<vmem>>, %arg3: memref<1x128xf32, #tpu.memory_space<vmem>>, %arg4: memref<128x128xf32, #tpu.memory_space<vmem>>, %arg5: memref<1x128xf32, #tpu.memory_space<vmem>>, %arg6: memref<128x128xf32, #tpu.memory_space<vmem>>, %arg7: memref<1x128xf32, #tpu.memory_space<vmem>>, %arg8: memref<128x128xf32, #tpu.memory_space<vmem>>, %arg9: memref<1x128xf32, #tpu.memory_space<vmem>>, %arg10: memref<128x128xf32, #tpu.memory_space<vmem>>) attributes {dimension_semantics = [#tpu.dimension_semantics<parallel>], iteration_bounds = array<i64: 2>, scalar_prefetch = 0 : i64, scratch_operands = 0 : i64, tpu.core_type = #tpu.core_type<tc>, window_params = [{transform_indices = @transform_0, window_bounds = array<i64: 128, 128>}, {pipeline_mode = #tpu.pipeline_mode<synchronous>, transform_indices = @transform_1, window_bounds = array<i64: 128, 128>}, {pipeline_mode = #tpu.pipeline_mode<synchronous>, transform_indices = @transform_2, window_bounds = array<i64: 1, 128>}, {pipeline_mode = #tpu.pipeline_mode<synchronous>, transform_indices = @transform_3, window_bounds = array<i64: 128, 128>}, {pipeline_mode = #tpu.pipeline_mode<synchronous>, transform_indices = @transform_4, window_bounds = array<i64: 1, 128>}, {pipeline_mode = #tpu.pipeline_mode<synchronous>, transform_indices = @transform_5, window_bounds = array<i64: 128, 128>}, {pipeline_mode = #tpu.pipeline_mode<synchronous>, transform_indices = @transform_6, window_bounds = array<i64: 1, 128>}, {pipeline_mode = #tpu.pipeline_mode<synchronous>, transform_indices = @transform_7, window_bounds = array<i64: 128, 128>}, {pipeline_mode = #tpu.pipeline_mode<synchronous>, transform_indices = @transform_8, window_bounds = array<i64: 1, 128>}, {transform_indices = @transform_9, window_bounds = array<i64: 128, 128>}]} {
    %c0 = arith.constant 0 : index
    %c0_0 = arith.constant 0 : index
    %0 = vector.load %arg1[%c0, %c0_0] : memref<128x128xf32, #tpu.memory_space<vmem>>, vector<128x128xf32>
    %c0_1 = arith.constant 0 : index
    %c0_2 = arith.constant 0 : index
    %1 = vector.load %arg2[%c0_1, %c0_2] : memref<128x128xf32, #tpu.memory_space<vmem>>, vector<128x128xf32>
    %c0_3 = arith.constant 0 : index
    %c0_4 = arith.constant 0 : index
    %2 = vector.load %arg3[%c0_3, %c0_4] : memref<1x128xf32, #tpu.memory_space<vmem>>, vector<1x128xf32>
    %cst = arith.constant dense<0.000000e+00> : vector<128x128xf32>
    %3 = tpu.matmul %0, %1, %cst {dimension_numbers = #tpu.dot_dimension_numbers<[1], [0], [0], [1], [0, 0, 1, 1], [], []>} : vector<128x128xf32>, vector<128x128xf32>, vector<128x128xf32> -> vector<128x128xf32>
    %4 = vector.broadcast %2 : vector<1x128xf32> to vector<128x128xf32>
    %5 = arith.addf %3, %4 : vector<128x128xf32>
    %c0_5 = arith.constant 0 : index
    %c0_6 = arith.constant 0 : index
    %6 = vector.load %arg4[%c0_5, %c0_6] : memref<128x128xf32, #tpu.memory_space<vmem>>, vector<128x128xf32>
    %c0_7 = arith.constant 0 : index
    %c0_8 = arith.constant 0 : index
    %7 = vector.load %arg5[%c0_7, %c0_8] : memref<1x128xf32, #tpu.memory_space<vmem>>, vector<1x128xf32>
    %cst_9 = arith.constant dense<0.000000e+00> : vector<128x128xf32>
    %8 = tpu.matmul %5, %6, %cst_9 {dimension_numbers = #tpu.dot_dimension_numbers<[1], [0], [0], [1], [0, 0, 1, 1], [], []>} : vector<128x128xf32>, vector<128x128xf32>, vector<128x128xf32> -> vector<128x128xf32>
    %9 = vector.broadcast %7 : vector<1x128xf32> to vector<128x128xf32>
    %10 = arith.addf %8, %9 : vector<128x128xf32>
    %cst_10 = arith.constant 0.000000e+00 : f32
    %11 = vector.broadcast %cst_10 : f32 to vector<128x128xf32>
    %12 = arith.maximumf %10, %11 : vector<128x128xf32>
    %c0_11 = arith.constant 0 : index
    %c0_12 = arith.constant 0 : index
    %13 = vector.load %arg6[%c0_11, %c0_12] : memref<128x128xf32, #tpu.memory_space<vmem>>, vector<128x128xf32>
    %c0_13 = arith.constant 0 : index
    %c0_14 = arith.constant 0 : index
    %14 = vector.load %arg7[%c0_13, %c0_14] : memref<1x128xf32, #tpu.memory_space<vmem>>, vector<1x128xf32>
    %cst_15 = arith.constant dense<0.000000e+00> : vector<128x128xf32>
    %15 = tpu.matmul %12, %13, %cst_15 {dimension_numbers = #tpu.dot_dimension_numbers<[1], [0], [0], [1], [0, 0, 1, 1], [], []>} : vector<128x128xf32>, vector<128x128xf32>, vector<128x128xf32> -> vector<128x128xf32>
    %16 = vector.broadcast %14 : vector<1x128xf32> to vector<128x128xf32>
    %17 = arith.addf %15, %16 : vector<128x128xf32>
    %cst_16 = arith.constant 0.000000e+00 : f32
    %18 = vector.broadcast %cst_16 : f32 to vector<128x128xf32>
    %19 = arith.maximumf %17, %18 : vector<128x128xf32>
    %c0_17 = arith.constant 0 : index
    %c0_18 = arith.constant 0 : index
    %20 = vector.load %arg8[%c0_17, %c0_18] : memref<128x128xf32, #tpu.memory_space<vmem>>, vector<128x128xf32>
    %c0_19 = arith.constant 0 : index
    %c0_20 = arith.constant 0 : index
    %21 = vector.load %arg9[%c0_19, %c0_20] : memref<1x128xf32, #tpu.memory_space<vmem>>, vector<1x128xf32>
    %cst_21 = arith.constant dense<0.000000e+00> : vector<128x128xf32>
    %22 = tpu.matmul %19, %20, %cst_21 {dimension_numbers = #tpu.dot_dimension_numbers<[1], [0], [0], [1], [0, 0, 1, 1], [], []>} : vector<128x128xf32>, vector<128x128xf32>, vector<128x128xf32> -> vector<128x128xf32>
    %23 = vector.broadcast %21 : vector<1x128xf32> to vector<128x128xf32>
    %24 = arith.addf %22, %23 : vector<128x128xf32>
    %c0_22 = arith.constant 0 : index
    %c0_23 = arith.constant 0 : index
    %25 = vector.load %arg10[%c0_22, %c0_23] : memref<128x128xf32, #tpu.memory_space<vmem>>, vector<128x128xf32>
    tpu.vector_store %arg10[%c0_22, %c0_23], %24 {strides = array<i32>} : memref<128x128xf32, #tpu.memory_space<vmem>>, vector<128x128xf32>,
    return
  }
  func.func @transform_0(%arg0: i32) -> (i32, i32) {
    %c0_i32 = arith.constant 0 : i32
    %c0_i32_0 = arith.constant 0 : i32
    return %arg0, %c0_i32 : i32, i32
  }
  func.func @transform_1(%arg0: i32) -> (i32, i32) {
    %c0_i32 = arith.constant 0 : i32
    %c0_i32_0 = arith.constant 0 : i32
    %c0_i32_1 = arith.constant 0 : i32
    return %c0_i32, %c0_i32_0 : i32, i32
  }
  func.func @transform_2(%arg0: i32) -> (i32, i32) {
    %c0_i32 = arith.constant 0 : i32
    %c0_i32_0 = arith.constant 0 : i32
    %c0_i32_1 = arith.constant 0 : i32
    return %c0_i32, %c0_i32_0 : i32, i32
  }
  func.func @transform_3(%arg0: i32) -> (i32, i32) {
    %c0_i32 = arith.constant 0 : i32
    %c0_i32_0 = arith.constant 0 : i32
    %c0_i32_1 = arith.constant 0 : i32
    return %c0_i32, %c0_i32_0 : i32, i32
  }
  func.func @transform_4(%arg0: i32) -> (i32, i32) {
    %c0_i32 = arith.constant 0 : i32
    %c0_i32_0 = arith.constant 0 : i32
    %c0_i32_1 = arith.constant 0 : i32
    return %c0_i32, %c0_i32_0 : i32, i32
  }
  func.func @transform_5(%arg0: i32) -> (i32, i32) {
    %c0_i32 = arith.constant 0 : i32
    %c0_i32_0 = arith.constant 0 : i32
    %c0_i32_1 = arith.constant 0 : i32
    return %c0_i32, %c0_i32_0 : i32, i32
  }
  func.func @transform_6(%arg0: i32) -> (i32, i32) {
    %c0_i32 = arith.constant 0 : i32
    %c0_i32_0 = arith.constant 0 : i32
    %c0_i32_1 = arith.constant 0 : i32
    return %c0_i32, %c0_i32_0 : i32, i32
  }
  func.func @transform_7(%arg0: i32) -> (i32, i32) {
    %c0_i32 = arith.constant 0 : i32
    %c0_i32_0 = arith.constant 0 : i32
    %c0_i32_1 = arith.constant 0 : i32
    return %c0_i32, %c0_i32_0 : i32, i32
  }
  func.func @transform_8(%arg0: i32) -> (i32, i32) {
    %c0_i32 = arith.constant 0 : i32
    %c0_i32_0 = arith.constant 0 : i32
    %c0_i32_1 = arith.constant 0 : i32
    return %c0_i32, %c0_i32_0 : i32, i32
  }
  func.func @transform_9(%arg0: i32) -> (i32, i32) {
    %c0_i32 = arith.constant 0 : i32
    %c0_i32_0 = arith.constant 0 : i32
    return %arg0, %c0_i32 : i32, i32
  }
}

</mosaic_0001>

<llo_original>
// kernel: _mlp_forward_impl.1
$region0: #{_mlp_forward_impl.1}
  #allocation0 [shape = 'u32[]', space=smem, size = 0x4, offset = 0x4, fixed_abs, tag = 'smem constant byte address 0x4 - core index']
  #allocation1 [shape = 'u32[144,128]{1,0:T(1,128)}', space=vmem, size = 0x12000, scoped, tag = 'internal scratch']
  %s0 = inlined_call_operand.vmem [shape: f32[256,128], index: 0, kind: input, shape index: {}]
  %s1 = inlined_call_operand.vmem [shape: f32[128,128], index: 1, kind: input, shape index: {}]
  %s2 = inlined_call_operand.vmem [shape: f32[1,128], index: 2, kind: input, shape index: {}]
  %s3 = inlined_call_operand.vmem [shape: f32[128,128], index: 3, kind: input, shape index: {}]
  %s4 = inlined_call_operand.vmem [shape: f32[1,128], index: 4, kind: input, shape index: {}]
  %s5 = inlined_call_operand.vmem [shape: f32[128,128], index: 5, kind: input, shape index: {}]
  %s6 = inlined_call_operand.vmem [shape: f32[1,128], index: 6, kind: input, shape index: {}]
  %s7 = inlined_call_operand.vmem [shape: f32[128,128], index: 7, kind: input, shape index: {}]
  %s8 = inlined_call_operand.vmem [shape: f32[1,128], index: 8, kind: input, shape index: {}]
  %s9 = inlined_call_operand.vmem [shape: f32[256,128], index: 9, kind: output, shape index: {}]
  %s10 = sld [smem:[#allocation0]]
  $region69: #{_mlp_forward_impl.1} parent=0
    _
  %s12 = ssub.s32 1, %s10
  %s13 = scalar_select 0, %s12, %s10
  loop: start=0, step=1, limit=4
  $region2: #{_mlp_forward_impl.1} parent=0 // loop_pre_header
    _
  $region3: #{_mlp_forward_impl.1} parent=0 // loop_header
    %s15 = sphi 0, %s19
    %p16 = scmp.ge.s32.totalorder %s15, 4
    %s25 = sphi 0, %s27
    %s28 = sphi 0, %s25
    %s29 = sphi 0, %s28
    %s45 = sphi 0, %s29
    %s49 = sphi 0, %s49
    %s51 = sphi 0, %s49
    %s52 = sphi 0, %s51
    %s66 = sphi 0, %s52
    %s70 = sphi 0, %s70
    %s72 = sphi 0, %s70
    %s73 = sphi 0, %s72
    %s87 = sphi 0, %s73
    %s91 = sphi 0, %s91
    %s93 = sphi 0, %s91
    %s94 = sphi 0, %s93
    %s108 = sphi 0, %s94
    %s112 = sphi 0, %s112
    %s114 = sphi 0, %s112
    %s115 = sphi 0, %s114
    %s129 = sphi 0, %s115
    %s133 = sphi 0, %s133
    %s135 = sphi 0, %s133
    %s136 = sphi 0, %s135
    %s150 = sphi 0, %s136
    %s154 = sphi 0, %s154
    %s156 = sphi 0, %s154
    %s157 = sphi 0, %s156
    %s171 = sphi 0, %s157
    %s175 = sphi 0, %s175
    %s177 = sphi 0, %s175
    %s178 = sphi 0, %s177
    %s192 = sphi 0, %s178
    %s196 = sphi 0, %s196
    %s198 = sphi 0, %s196
    %s199 = sphi 0, %s198
    %s213 = sphi 0, %s199
    %s219 = sphi 0, %s221
    %s222 = sphi 0, %s219
    %s223 = sphi 0, %s222
    %s239 = sphi 0, %s223
  $region4: #{_mlp_forward_impl.1} parent=0 // loop_header_branch
    %18 = sbr.rel (%p16) target = $region8
  $region5: #{_mlp_forward_impl.1} parent=0 // loop_body
    %s20 = ssub.s32 %s15, 1
    %s21 = ssub.s32 %s15, 2
    %s22 = sadd.s32 %s15, 1
    %s23 = ssub.s32 %s15, %s22
    %p24 = scmp.eq.s32.totalorder %s23, 0
    %s26 = sadd.s32 %s25, 1
    %s27 = scalar_select %p24, %s25, %s26
    %p30 = pneg %p24
    %p31 = scmp.eq.s32.totalorder %s15, 1
    %p32 = por %p30, %p31
    %p33 = scmp.ne.s32.totalorder %s25, %s28
    %p34 = scmp.eq.s32.totalorder %s15, 0
    %p35 = por %p33, %p34
    %p36 = scmp.ne.s32.totalorder %s25, %s28
    %p37 = scmp.eq.s32.totalorder %s20, 1
    %p38 = por %p36, %p37
    %p39 = scmp.ne.s32.totalorder %s28, %s29
    %p40 = scmp.eq.s32.totalorder %s20, 0
    %p41 = por %p39, %p40
    %p42 = scmp.ne.s32.totalorder %s28, %s29
    %p43 = scmp.eq.s32.totalorder %s21, 1
    %p44 = por %p42, %p43
    %p46 = scmp.ne.s32.totalorder %s29, %s45
    %p47 = scmp.eq.s32.totalorder %s21, 0
    %p48 = por %p46, %p47
    %s50 = sadd.s32 %s49, 1
    %p53 = scmp.eq.s32.totalorder %s15, 1
    %p54 = scmp.ne.s32.totalorder %s49, %s51
    %p55 = scmp.eq.s32.totalorder %s15, 0
    %p56 = por %p54, %p55
    %p57 = scmp.ne.s32.totalorder %s49, %s51
    %p58 = scmp.eq.s32.totalorder %s20, 1
    %p59 = por %p57, %p58
    %p60 = scmp.ne.s32.totalorder %s51, %s52
    %p61 = scmp.eq.s32.totalorder %s20, 0
    %p62 = por %p60, %p61
    %p63 = scmp.ne.s32.totalorder %s51, %s52
    %p64 = scmp.eq.s32.totalorder %s21, 1
    %p65 = por %p63, %p64
    %p67 = scmp.ne.s32.totalorder %s52, %s66
    %p68 = scmp.eq.s32.totalorder %s21, 0
    %p69 = por %p67, %p68
    %s71 = sadd.s32 %s70, 1
    %p74 = scmp.eq.s32.totalorder %s15, 1
    %p75 = scmp.ne.s32.totalorder %s70, %s72
    %p76 = scmp.eq.s32.totalorder %s15, 0
    %p77 = por %p75, %p76
    %p78 = scmp.ne.s32.totalorder %s70, %s72
    %p79 = scmp.eq.s32.totalorder %s20, 1
    %p80 = por %p78, %p79
    %p81 = scmp.ne.s32.totalorder %s72, %s73
    %p82 = scmp.eq.s32.totalorder %s20, 0
    %p83 = por %p81, %p82
    %p84 = scmp.ne.s32.totalorder %s72, %s73
    %p85 = scmp.eq.s32.totalorder %s21, 1
    %p86 = por %p84, %p85
    %p88 = scmp.ne.s32.totalorder %s73, %s87
    %p89 = scmp.eq.s32.totalorder %s21, 0
    %p90 = por %p88, %p89
    %s92 = sadd.s32 %s91, 1
    %p95 = scmp.eq.s32.totalorder %s15, 1
    %p96 = scmp.ne.s32.totalorder %s91, %s93
    %p97 = scmp.eq.s32.totalorder %s15, 0
    %p98 = por %p96, %p97
    %p99 = scmp.ne.s32.totalorder %s91, %s93
    %p100 = scmp.eq.s32.totalorder %s20, 1
    %p101 = por %p99, %p100
    %p102 = scmp.ne.s32.totalorder %s93, %s94
    %p103 = scmp.eq.s32.totalorder %s20, 0
    %p104 = por %p102, %p103
    %p105 = scmp.ne.s32.totalorder %s93, %s94
    %p106 = scmp.eq.s32.totalorder %s21, 1
    %p107 = por %p105, %p106
    %p109 = scmp.ne.s32.totalorder %s94, %s108
    %p110 = scmp.eq.s32.totalorder %s21, 0
    %p111 = por %p109, %p110
    %s113 = sadd.s32 %s112, 1
    %p116 = scmp.eq.s32.totalorder %s15, 1
    %p117 = scmp.ne.s32.totalorder %s112, %s114
    %p118 = scmp.eq.s32.totalorder %s15, 0
    %p119 = por %p117, %p118
    %p120 = scmp.ne.s32.totalorder %s112, %s114
    %p121 = scmp.eq.s32.totalorder %s20, 1
    %p122 = por %p120, %p121
    %p123 = scmp.ne.s32.totalorder %s114, %s115
    %p124 = scmp.eq.s32.totalorder %s20, 0
    %p125 = por %p123, %p124
    %p126 = scmp.ne.s32.totalorder %s114, %s115
    %p127 = scmp.eq.s32.totalorder %s21, 1
    %p128 = por %p126, %p127
    %p130 = scmp.ne.s32.totalorder %s115, %s129
    %p131 = scmp.eq.s32.totalorder %s21, 0
    %p132 = por %p130, %p131
    %s134 = sadd.s32 %s133, 1
    %p137 = scmp.eq.s32.totalorder %s15, 1
    %p138 = scmp.ne.s32.totalorder %s133, %s135
    %p139 = scmp.eq.s32.totalorder %s15, 0
    %p140 = por %p138, %p139
    %p141 = scmp.ne.s32.totalorder %s133, %s135
    %p142 = scmp.eq.s32.totalorder %s20, 1
    %p143 = por %p141, %p142
    %p144 = scmp.ne.s32.totalorder %s135, %s136
    %p145 = scmp.eq.s32.totalorder %s20, 0
    %p146 = por %p144, %p145
    %p147 = scmp.ne.s32.totalorder %s135, %s136
    %p148 = scmp.eq.s32.totalorder %s21, 1
    %p149 = por %p147, %p148
    %p151 = scmp.ne.s32.totalorder %s136, %s150
    %p152 = scmp.eq.s32.totalorder %s21, 0
    %p153 = por %p151, %p152
    %s155 = sadd.s32 %s154, 1
    %p158 = scmp.eq.s32.totalorder %s15, 1
    %p159 = scmp.ne.s32.totalorder %s154, %s156
    %p160 = scmp.eq.s32.totalorder %s15, 0
    %p161 = por %p159, %p160
    %p162 = scmp.ne.s32.totalorder %s154, %s156
    %p163 = scmp.eq.s32.totalorder %s20, 1
    %p164 = por %p162, %p163
    %p165 = scmp.ne.s32.totalorder %s156, %s157
    %p166 = scmp.eq.s32.totalorder %s20, 0
    %p167 = por %p165, %p166
    %p168 = scmp.ne.s32.totalorder %s156, %s157
    %p169 = scmp.eq.s32.totalorder %s21, 1
    %p170 = por %p168, %p169
    %p172 = scmp.ne.s32.totalorder %s157, %s171
    %p173 = scmp.eq.s32.totalorder %s21, 0
    %p174 = por %p172, %p173
    %s176 = sadd.s32 %s175, 1
    %p179 = scmp.eq.s32.totalorder %s15, 1
    %p180 = scmp.ne.s32.totalorder %s175, %s177
    %p181 = scmp.eq.s32.totalorder %s15, 0
    %p182 = por %p180, %p181
    %p183 = scmp.ne.s32.totalorder %s175, %s177
    %p184 = scmp.eq.s32.totalorder %s20, 1
    %p185 = por %p183, %p184
    %p186 = scmp.ne.s32.totalorder %s177, %s178
    %p187 = scmp.eq.s32.totalorder %s20, 0
    %p188 = por %p186, %p187
    %p189 = scmp.ne.s32.totalorder %s177, %s178
    %p190 = scmp.eq.s32.totalorder %s21, 1
    %p191 = por %p189, %p190
    %p193 = scmp.ne.s32.totalorder %s178, %s192
    %p194 = scmp.eq.s32.totalorder %s21, 0
    %p195 = por %p193, %p194
    %s197 = sadd.s32 %s196, 1
    %p200 = scmp.eq.s32.totalorder %s15, 1
    %p201 = scmp.ne.s32.totalorder %s196, %s198
    %p202 = scmp.eq.s32.totalorder %s15, 0
    %p203 = por %p201, %p202
    %p204 = scmp.ne.s32.totalorder %s196, %s198
    %p205 = scmp.eq.s32.totalorder %s20, 1
    %p206 = por %p204, %p205
    %p207 = scmp.ne.s32.totalorder %s198, %s199
    %p208 = scmp.eq.s32.totalorder %s20, 0
    %p209 = por %p207, %p208
    %p210 = scmp.ne.s32.totalorder %s198, %s199
    %p211 = scmp.eq.s32.totalorder %s21, 1
    %p212 = por %p210, %p211
    %p214 = scmp.ne.s32.totalorder %s199, %s213
    %p215 = scmp.eq.s32.totalorder %s21, 0
    %p216 = por %p214, %p215
    %s217 = ssub.s32 %s15, %s22
    %p218 = scmp.eq.s32.totalorder %s217, 0
    %s220 = sadd.s32 %s219, 1
    %s221 = scalar_select %p218, %s219, %s220
    %p224 = pneg %p218
    %p225 = scmp.eq.s32.totalorder %s15, 1
    %p226 = por %p224, %p225
    %p227 = scmp.ne.s32.totalorder %s219, %s222
    %p228 = scmp.eq.s32.totalorder %s15, 0
    %p229 = por %p227, %p228
    %p230 = scmp.ne.s32.totalorder %s219, %s222
    %p231 = scmp.eq.s32.totalorder %s20, 1
    %p232 = por %p230, %p231
    %p233 = scmp.ne.s32.totalorder %s222, %s223
    %p234 = scmp.eq.s32.totalorder %s20, 0
    %p235 = por %p233, %p234
    %p236 = scmp.ne.s32.totalorder %s222, %s223
    %p237 = scmp.eq.s32.totalorder %s21, 1
    %p238 = por %p236, %p237
    %p240 = scmp.ne.s32.totalorder %s223, %s239
    %p241 = scmp.eq.s32.totalorder %s21, 0
    %p242 = por %p240, %p241
    %p243 = scmp.le.s32.totalorder 1, %s15
    %p244 = scmp.lt.s32.totalorder %s15, 3
    %p245 = pnand %p243, %p244
    %p246 = pneg %p245
    // Predicated region
    $region9: #{_mlp_forward_impl.1} parent=5 // pred_check
      _
    $region10: #{_mlp_forward_impl.1} parent=5 // pred_check_branch
      %248 = sbr.rel (%p245) target = $region12
    $region11: #{_mlp_forward_impl.1} parent=5 // pred_region
      %s249 = ssub.s32 %s15, 1
      // Predicated region
      $region13: #{_mlp_forward_impl.1} parent=11 // pred_check
        %p250 = pneg %p62
      $region14: #{_mlp_forward_impl.1} parent=11 // pred_check_branch
        %252 = sbr.rel (%p250) target = $region16
      $region15: #{_mlp_forward_impl.1} parent=11 // pred_region
        _
      $region16: #{_mlp_forward_impl.1} parent=11 // pred_fallthru
        _
      // Predicated region
      $region17: #{_mlp_forward_impl.1} parent=11 // pred_check
        %p253 = pneg %p83
      $region18: #{_mlp_forward_impl.1} parent=11 // pred_check_branch
        %255 = sbr.rel (%p253) target = $region20
      $region19: #{_mlp_forward_impl.1} parent=11 // pred_region
        _
      $region20: #{_mlp_forward_impl.1} parent=11 // pred_fallthru
        _
      // Predicated region
      $region21: #{_mlp_forward_impl.1} parent=11 // pred_check
        %p256 = pneg %p104
      $region22: #{_mlp_forward_impl.1} parent=11 // pred_check_branch
        %258 = sbr.rel (%p256) target = $region24
      $region23: #{_mlp_forward_impl.1} parent=11 // pred_region
        _
      $region24: #{_mlp_forward_impl.1} parent=11 // pred_fallthru
        _
      // Predicated region
      $region25: #{_mlp_forward_impl.1} parent=11 // pred_check
        %p259 = pneg %p125
      $region26: #{_mlp_forward_impl.1} parent=11 // pred_check_branch
        %261 = sbr.rel (%p259) target = $region28
      $region27: #{_mlp_forward_impl.1} parent=11 // pred_region
        _
      $region28: #{_mlp_forward_impl.1} parent=11 // pred_fallthru
        _
      // Predicated region
      $region29: #{_mlp_forward_impl.1} parent=11 // pred_check
        %p262 = pneg %p146
      $region30: #{_mlp_forward_impl.1} parent=11 // pred_check_branch
        %264 = sbr.rel (%p262) target = $region32
      $region31: #{_mlp_forward_impl.1} parent=11 // pred_region
        _
      $region32: #{_mlp_forward_impl.1} parent=11 // pred_fallthru
        _
      // Predicated region
      $region33: #{_mlp_forward_impl.1} parent=11 // pred_check
        %p265 = pneg %p167
      $region34: #{_mlp_forward_impl.1} parent=11 // pred_check_branch
        %267 = sbr.rel (%p265) target = $region36
      $region35: #{_mlp_forward_impl.1} parent=11 // pred_region
        _
      $region36: #{_mlp_forward_impl.1} parent=11 // pred_fallthru
        _
      // Predicated region
      $region37: #{_mlp_forward_impl.1} parent=11 // pred_check
        %p268 = pneg %p188
      $region38: #{_mlp_forward_impl.1} parent=11 // pred_check_branch
        %270 = sbr.rel (%p268) target = $region40
      $region39: #{_mlp_forward_impl.1} parent=11 // pred_region
        _
      $region40: #{_mlp_forward_impl.1} parent=11 // pred_fallthru
        _
      // Predicated region
      $region41: #{_mlp_forward_impl.1} parent=11 // pred_check
        %p271 = pneg %p209
      $region42: #{_mlp_forward_impl.1} parent=11 // pred_check_branch
        %273 = sbr.rel (%p271) target = $region44
      $region43: #{_mlp_forward_impl.1} parent=11 // pred_region
        _
      $region44: #{_mlp_forward_impl.1} parent=11 // pred_fallthru
        _
    $region12: #{_mlp_forward_impl.1} parent=5 // pred_fallthru
      _
    %p274 = scmp.lt.s32.totalorder %s15, 2
    // Predicated region
    $region45: #{_mlp_forward_impl.1} parent=5 // pred_check
      %p275 = pneg %p274
    $region46: #{_mlp_forward_impl.1} parent=5 // pred_check_branch
      %277 = sbr.rel (%p275) target = $region48
    $region47: #{_mlp_forward_impl.1} parent=5 // pred_region
      // Predicated region
      $region49: #{_mlp_forward_impl.1} parent=47 // pred_check
        %p278 = pneg %p35
      $region50: #{_mlp_forward_impl.1} parent=47 // pred_check_branch
        %280 = sbr.rel (%p278) target = $region52
      $region51: #{_mlp_forward_impl.1} parent=47 // pred_region
        %s281 = smul.u32 16, %s15
        %p282 = scmp.lt.s32.totalorder %s281, 31
        %s283 = scalar_select %p282, %s281, 31
        %s284 = smul.addr %s283, 8
        %s285 = scalar_lea.vmem %s0, %s284
        %s286 = smul.u32 16, %s15
      $region52: #{_mlp_forward_impl.1} parent=47 // pred_fallthru
        _
    $region48: #{_mlp_forward_impl.1} parent=5 // pred_fallthru
      _
    %p287 = scmp.le.s32.totalorder 1, %s15
    %p288 = scmp.lt.s32.totalorder %s15, 3
    %p289 = pnand %p287, %p288
    %p290 = pneg %p289
    // Predicated region
    $region53: #{_mlp_forward_impl.1} parent=5 // pred_check
      _
    $region54: #{_mlp_forward_impl.1} parent=5 // pred_check_branch
      %292 = sbr.rel (%p289) target = $region56
    $region55: #{_mlp_forward_impl.1} parent=5 // pred_region
      %s293 = ssub.s32 %s15, 1
      %s294 = smul.u32 16, %s20
      %p295 = scmp.lt.s32.totalorder %s294, 31
      %s296 = scalar_select %p295, %s294, 31
      %s297 = smul.addr %s296, 8
      %s298 = scalar_lea.vmem %s0, %s297
      %p299 = pneg %p41
      %p300 = pneg %p38
      %p301 = pneg %p62
      %p302 = pneg %p59
      %p303 = pneg %p83
      %p304 = pneg %p80
      %p305 = pneg %p104
      %p306 = pneg %p101
      %p307 = pneg %p125
      %p308 = pneg %p122
      %p309 = pneg %p146
      %p310 = pneg %p143
      %p311 = pneg %p167
      %p312 = pneg %p164
      %p313 = pneg %p188
      %p314 = pneg %p185
      %p315 = pneg %p209
      %p316 = pneg %p206
      %p317 = pneg %p235
      %p318 = pneg %p232
      %s319 = smul.u32 16, %s20
      %p320 = scmp.lt.s32.totalorder %s319, 31
      %s321 = scalar_select %p320, %s319, 31
      %s322 = smul.addr %s321, 8
      %s323 = scalar_lea.vmem %s9, %s322
      %s324 = smul.u32 16, %s20
      %p325 = scmp.lt.s32.totalorder %s324, 31
      %s326 = scalar_select %p325, %s324, 31
      %s327 = smul.addr %s326, 8
      %s328 = scalar_lea.vmem %s0, %s327
      %s329 = smul.u32 16, %s20
      %s330 = smul.u32 16, %s20
      %p331 = scmp.lt.s32.totalorder %s330, 31
      %s332 = scalar_select %p331, %s330, 31
      %s333 = smul.addr %s332, 8
      %s334 = scalar_lea.vmem %s9, %s333
      %s335 = smul.u32 16, %s20
      %v336 = vld [vmem:[%s328] sm:$0xff]
      %v337 = vld [vmem:[%s328 + $0x8] sm:$0xff]
      %v338 = vld [vmem:[%s328 + $0x10] sm:$0xff]
      %v339 = vld [vmem:[%s328 + $0x18] sm:$0xff]
      %v340 = vld [vmem:[%s328 + $0x20] sm:$0xff]
      %v341 = vld [vmem:[%s328 + $0x28] sm:$0xff]
      %v342 = vld [vmem:[%s328 + $0x30] sm:$0xff]
      %v343 = vld [vmem:[%s328 + $0x38] sm:$0xff]
      %v344 = vld [vmem:[%s328 + $0x40] sm:$0xff]
      %v345 = vld [vmem:[%s328 + $0x48] sm:$0xff]
      %v346 = vld [vmem:[%s328 + $0x50] sm:$0xff]
      %v347 = vld [vmem:[%s328 + $0x58] sm:$0xff]
      %v348 = vld [vmem:[%s328 + $0x60] sm:$0xff]
      %v349 = vld [vmem:[%s328 + $0x68] sm:$0xff]
      %v350 = vld [vmem:[%s328 + $0x70] sm:$0xff]
      %v351 = vld [vmem:[%s328 + $0x78] sm:$0xff]
      %v352 = vld [vmem:[%s1] sm:$0xff]
      %v353 = vld [vmem:[%s1 + $0x8] sm:$0xff]
      %v354 = vld [vmem:[%s1 + $0x10] sm:$0xff]
      %v355 = vld [vmem:[%s1 + $0x18] sm:$0xff]
      %v356 = vld [vmem:[%s1 + $0x20] sm:$0xff]
      %v357 = vld [vmem:[%s1 + $0x28] sm:$0xff]
      %v358 = vld [vmem:[%s1 + $0x30] sm:$0xff]
      %v359 = vld [vmem:[%s1 + $0x38] sm:$0xff]
      %v360 = vld [vmem:[%s1 + $0x40] sm:$0xff]
      %v361 = vld [vmem:[%s1 + $0x48] sm:$0xff]
      %v362 = vld [vmem:[%s1 + $0x50] sm:$0xff]
      %v363 = vld [vmem:[%s1 + $0x58] sm:$0xff]
      %v364 = vld [vmem:[%s1 + $0x60] sm:$0xff]
      %v365 = vld [vmem:[%s1 + $0x68] sm:$0xff]
      %v366 = vld [vmem:[%s1 + $0x70] sm:$0xff]
      %v367 = vld [vmem:[%s1 + $0x78] sm:$0xff]
      %v368 = vld [vmem:[%s2] sm:$0x1]
      %v370 = vlaneseq
      %v371 = vshrl.u32 %v370, 7
      %v372 = vsub.s32 0, %v371
      %v373 = vrot.slane %v368, %v372
      %375 = vmatprep.subr.mxu0 0.0
      %376 = vmatpush1.msra.mxu0 %v367
      %377 = vmatprep.subr.mxu0 0.0
      %378 = vmatpush1.msra.mxu0 %v366
      %379 = vmatprep.subr.mxu0 0.0
      %380 = vmatpush1.msra.mxu0 %v365
      %381 = vmatprep.subr.mxu0 0.0
      %382 = vmatpush1.msra.mxu0 %v364
      %383 = vmatprep.subr.mxu0 0.0
      %384 = vmatpush1.msra.mxu0 %v363
      %385 = vmatprep.subr.mxu0 0.0
      %386 = vmatpush1.msra.mxu0 %v362
      %387 = vmatprep.subr.mxu0 0.0
      %388 = vmatpush1.msra.mxu0 %v361
      %389 = vmatprep.subr.mxu0 0.0
      %390 = vmatpush1.msra.mxu0 %v360
      %391 = vmatprep.subr.mxu0 0.0
      %392 = vmatpush1.msra.mxu0 %v359
      %393 = vmatprep.subr.mxu0 0.0
      %394 = vmatpush1.msra.mxu0 %v358
      %395 = vmatprep.subr.mxu0 0.0
      %396 = vmatpush1.msra.mxu0 %v357
      %397 = vmatprep.subr.mxu0 0.0
      %398 = vmatpush1.msra.mxu0 %v356
      %399 = vmatprep.subr.mxu0 0.0
      %400 = vmatpush1.msra.mxu0 %v355
      %401 = vmatprep.subr.mxu0 0.0
      %402 = vmatpush1.msra.mxu0 %v354
      %403 = vmatprep.subr.mxu0 0.0
      %404 = vmatpush1.msra.mxu0 %v353
      %405 = vmatprep.subr.mxu0 0.0
      %406 = vmatpush1.msra.mxu0 %v352
      %407 = vmatprep.subr.mxu0 0.0
      %408 = vmatpush2.msra.mxu0 0.0
      %409 = vmatprep.subr.mxu0 0.0
      %410 = vmatpush2.msra.mxu0 0.0
      %411 = vmatprep.subr.mxu0 0.0
      %412 = vmatpush2.msra.mxu0 0.0
      %413 = vmatprep.subr.mxu0 0.0
      %414 = vmatpush2.msra.mxu0 0.0
      %415 = vmatprep.subr.mxu0 0.0
      %416 = vmatpush2.msra.mxu0 0.0
      %417 = vmatprep.subr.mxu0 0.0
      %418 = vmatpush2.msra.mxu0 0.0
      %419 = vmatprep.subr.mxu0 0.0
      %420 = vmatpush2.msra.mxu0 0.0
      %421 = vmatprep.subr.mxu0 0.0
      %422 = vmatpush2.msra.mxu0 0.0
      %423 = vmatprep.subr.mxu0 0.0
      %424 = vmatpush2.msra.mxu0 0.0
      %425 = vmatprep.subr.mxu0 0.0
      %426 = vmatpush2.msra.mxu0 0.0
      %427 = vmatprep.subr.mxu0 0.0
      %428 = vmatpush2.msra.mxu0 0.0
      %429 = vmatprep.subr.mxu0 0.0
      %430 = vmatpush2.msra.mxu0 0.0
      %431 = vmatprep.subr.mxu0 0.0
      %432 = vmatpush2.msra.mxu0 0.0
      %433 = vmatprep.subr.mxu0 0.0
      %434 = vmatpush2.msra.mxu0 0.0
      %435 = vmatprep.subr.mxu0 0.0
      %436 = vmatpush2.msra.mxu0 0.0
      %437 = vmatprep.subr.mxu0 0.0
      %438 = vmatpush2.msra.mxu0 0.0
      %439 = vmatprep.mubr.f32.mxu0 0.0
      %440 = vmatmul.mubr.f32.gmra.mxu0 %v336
      %v441 = vpop.f32.mrf.mxu0
      %v442 = vadd.f32 %v373, %v441
      %v443 = vpop.f32.mrf.mxu0
      %444 = vmatprep.mubr.f32.mxu0 0.0
      %445 = vmatmul.mubr.f32.gmra.mxu0 %v337
      %v446 = vpop.f32.mrf.mxu0
      %v447 = vadd.f32 %v373, %v446
      %v448 = vpop.f32.mrf.mxu0
      %449 = vmatprep.mubr.f32.mxu0 0.0
      %450 = vmatmul.mubr.f32.gmra.mxu0 %v338
      %v451 = vpop.f32.mrf.mxu0
      %v452 = vadd.f32 %v373, %v451
      %v453 = vpop.f32.mrf.mxu0
      %454 = vmatprep.mubr.f32.mxu0 0.0
      %455 = vmatmul.mubr.f32.gmra.mxu0 %v339
      %v456 = vpop.f32.mrf.mxu0
      %v457 = vadd.f32 %v373, %v456
      %v458 = vpop.f32.mrf.mxu0
      %459 = vmatprep.mubr.f32.mxu0 0.0
      %460 = vmatmul.mubr.f32.gmra.mxu0 %v340
      %v461 = vpop.f32.mrf.mxu0
      %v462 = vadd.f32 %v373, %v461
      %v463 = vpop.f32.mrf.mxu0
      %464 = vmatprep.mubr.f32.mxu0 0.0
      %465 = vmatmul.mubr.f32.gmra.mxu0 %v341
      %v466 = vpop.f32.mrf.mxu0
      %v467 = vadd.f32 %v373, %v466
      %v468 = vpop.f32.mrf.mxu0
      %469 = vmatprep.mubr.f32.mxu0 0.0
      %470 = vmatmul.mubr.f32.gmra.mxu0 %v342
      %v471 = vpop.f32.mrf.mxu0
      %v472 = vadd.f32 %v373, %v471
      %v473 = vpop.f32.mrf.mxu0
      %474 = vmatprep.mubr.f32.mxu0 0.0
      %475 = vmatmul.mubr.f32.gmra.mxu0 %v343
      %v476 = vpop.f32.mrf.mxu0
      %v477 = vadd.f32 %v373, %v476
      %v478 = vpop.f32.mrf.mxu0
      %479 = vmatprep.mubr.f32.mxu0 0.0
      %480 = vmatmul.mubr.f32.gmra.mxu0 %v344
      %v481 = vpop.f32.mrf.mxu0
      %v482 = vadd.f32 %v373, %v481
      %v483 = vpop.f32.mrf.mxu0
      %484 = vmatprep.mubr.f32.mxu0 0.0
      %485 = vmatmul.mubr.f32.gmra.mxu0 %v345
      %v486 = vpop.f32.mrf.mxu0
      %v487 = vadd.f32 %v373, %v486
      %v488 = vpop.f32.mrf.mxu0
      %489 = vmatprep.mubr.f32.mxu0 0.0
      %490 = vmatmul.mubr.f32.gmra.mxu0 %v346
      %v491 = vpop.f32.mrf.mxu0
      %v492 = vadd.f32 %v373, %v491
      %v493 = vpop.f32.mrf.mxu0
      %494 = vmatprep.mubr.f32.mxu0 0.0
      %495 = vmatmul.mubr.f32.gmra.mxu0 %v347
      %v496 = vpop.f32.mrf.mxu0
      %v497 = vadd.f32 %v373, %v496
      %v498 = vpop.f32.mrf.mxu0
      %499 = vmatprep.mubr.f32.mxu0 0.0
      %500 = vmatmul.mubr.f32.gmra.mxu0 %v348
      %v501 = vpop.f32.mrf.mxu0
      %v502 = vadd.f32 %v373, %v501
      %v503 = vpop.f32.mrf.mxu0
      %504 = vmatprep.mubr.f32.mxu0 0.0
      %505 = vmatmul.mubr.f32.gmra.mxu0 %v349
      %v506 = vpop.f32.mrf.mxu0
      %v507 = vadd.f32 %v373, %v506
      %v508 = vpop.f32.mrf.mxu0
      %509 = vmatprep.mubr.f32.mxu0 0.0
      %510 = vmatmul.mubr.f32.gmra.mxu0 %v350
      %v511 = vpop.f32.mrf.mxu0
      %v512 = vadd.f32 %v373, %v511
      %v513 = vpop.f32.mrf.mxu0
      %514 = vmatprep.mubr.f32.mxu0 0.0
      %515 = vmatmul.mubr.f32.gmra.mxu0 %v351
      %v516 = vpop.f32.mrf.mxu0
      %v517 = vadd.f32 %v373, %v516
      %v518 = vpop.f32.mrf.mxu0
      %519 = vdwg.mxu0
      %v520 = vld [vmem:[%s3] sm:$0xff]
      %v521 = vld [vmem:[%s3 + $0x8] sm:$0xff]
      %v522 = vld [vmem:[%s3 + $0x10] sm:$0xff]
      %v523 = vld [vmem:[%s3 + $0x18] sm:$0xff]
      %v524 = vld [vmem:[%s3 + $0x20] sm:$0xff]
      %v525 = vld [vmem:[%s3 + $0x28] sm:$0xff]
      %v526 = vld [vmem:[%s3 + $0x30] sm:$0xff]
      %v527 = vld [vmem:[%s3 + $0x38] sm:$0xff]
      %v528 = vld [vmem:[%s3 + $0x40] sm:$0xff]
      %v529 = vld [vmem:[%s3 + $0x48] sm:$0xff]
      %v530 = vld [vmem:[%s3 + $0x50] sm:$0xff]
      %v531 = vld [vmem:[%s3 + $0x58] sm:$0xff]
      %v532 = vld [vmem:[%s3 + $0x60] sm:$0xff]
      %v533 = vld [vmem:[%s3 + $0x68] sm:$0xff]
      %v534 = vld [vmem:[%s3 + $0x70] sm:$0xff]
      %v535 = vld [vmem:[%s3 + $0x78] sm:$0xff]
      %v536 = vld [vmem:[%s4] sm:$0x1]
      %v538 = vlaneseq
      %v539 = vshrl.u32 %v538, 7
      %v540 = vsub.s32 0, %v539
      %v541 = vrot.slane %v536, %v540
      %543 = vmatprep.subr.mxu0 0.0
      %544 = vmatpush1.msra.mxu0 %v535
      %545 = vmatprep.subr.mxu0 0.0
      %546 = vmatpush1.msra.mxu0 %v534
      %547 = vmatprep.subr.mxu0 0.0
      %548 = vmatpush1.msra.mxu0 %v533
      %549 = vmatprep.subr.mxu0 0.0
      %550 = vmatpush1.msra.mxu0 %v532
      %551 = vmatprep.subr.mxu0 0.0
      %552 = vmatpush1.msra.mxu0 %v531
      %553 = vmatprep.subr.mxu0 0.0
      %554 = vmatpush1.msra.mxu0 %v530
      %555 = vmatprep.subr.mxu0 0.0
      %556 = vmatpush1.msra.mxu0 %v529
      %557 = vmatprep.subr.mxu0 0.0
      %558 = vmatpush1.msra.mxu0 %v528
      %559 = vmatprep.subr.mxu0 0.0
      %560 = vmatpush1.msra.mxu0 %v527
      %561 = vmatprep.subr.mxu0 0.0
      %562 = vmatpush1.msra.mxu0 %v526
      %563 = vmatprep.subr.mxu0 0.0
      %564 = vmatpush1.msra.mxu0 %v525
      %565 = vmatprep.subr.mxu0 0.0
      %566 = vmatpush1.msra.mxu0 %v524
      %567 = vmatprep.subr.mxu0 0.0
      %568 = vmatpush1.msra.mxu0 %v523
      %569 = vmatprep.subr.mxu0 0.0
      %570 = vmatpush1.msra.mxu0 %v522
      %571 = vmatprep.subr.mxu0 0.0
      %572 = vmatpush1.msra.mxu0 %v521
      %573 = vmatprep.subr.mxu0 0.0
      %574 = vmatpush1.msra.mxu0 %v520
      %575 = vmatprep.subr.mxu0 0.0
      %576 = vmatpush2.msra.mxu0 0.0
      %577 = vmatprep.subr.mxu0 0.0
      %578 = vmatpush2.msra.mxu0 0.0
      %579 = vmatprep.subr.mxu0 0.0
      %580 = vmatpush2.msra.mxu0 0.0
      %581 = vmatprep.subr.mxu0 0.0
      %582 = vmatpush2.msra.mxu0 0.0
      %583 = vmatprep.subr.mxu0 0.0
      %584 = vmatpush2.msra.mxu0 0.0
      %585 = vmatprep.subr.mxu0 0.0
      %586 = vmatpush2.msra.mxu0 0.0
      %587 = vmatprep.subr.mxu0 0.0
      %588 = vmatpush2.msra.mxu0 0.0
      %589 = vmatprep.subr.mxu0 0.0
      %590 = vmatpush2.msra.mxu0 0.0
      %591 = vmatprep.subr.mxu0 0.0
      %592 = vmatpush2.msra.mxu0 0.0
      %593 = vmatprep.subr.mxu0 0.0
      %594 = vmatpush2.msra.mxu0 0.0
      %595 = vmatprep.subr.mxu0 0.0
      %596 = vmatpush2.msra.mxu0 0.0
      %597 = vmatprep.subr.mxu0 0.0
      %598 = vmatpush2.msra.mxu0 0.0
      %599 = vmatprep.subr.mxu0 0.0
      %600 = vmatpush2.msra.mxu0 0.0
      %601 = vmatprep.subr.mxu0 0.0
      %602 = vmatpush2.msra.mxu0 0.0
      %603 = vmatprep.subr.mxu0 0.0
      %604 = vmatpush2.msra.mxu0 0.0
      %605 = vmatprep.subr.mxu0 0.0
      %606 = vmatpush2.msra.mxu0 0.0
      %607 = vmatprep.mubr.f32.mxu0 0.0
      %608 = vmatmul.mubr.f32.gmra.mxu0 %v442
      %v609 = vpop.f32.mrf.mxu0
      %v610 = vadd.f32 %v541, %v609
      %v611 = vpop.f32.mrf.mxu0
      %612 = vmatprep.mubr.f32.mxu0 0.0
      %613 = vmatmul.mubr.f32.gmra.mxu0 %v447
      %v614 = vpop.f32.mrf.mxu0
      %v615 = vadd.f32 %v541, %v614
      %v616 = vpop.f32.mrf.mxu0
      %617 = vmatprep.mubr.f32.mxu0 0.0
      %618 = vmatmul.mubr.f32.gmra.mxu0 %v452
      %v619 = vpop.f32.mrf.mxu0
      %v620 = vadd.f32 %v541, %v619
      %v621 = vpop.f32.mrf.mxu0
      %622 = vmatprep.mubr.f32.mxu0 0.0
      %623 = vmatmul.mubr.f32.gmra.mxu0 %v457
      %v624 = vpop.f32.mrf.mxu0
      %v625 = vadd.f32 %v541, %v624
      %v626 = vpop.f32.mrf.mxu0
      %627 = vmatprep.mubr.f32.mxu0 0.0
      %628 = vmatmul.mubr.f32.gmra.mxu0 %v462
      %v629 = vpop.f32.mrf.mxu0
      %v630 = vadd.f32 %v541, %v629
      %v631 = vpop.f32.mrf.mxu0
      %632 = vmatprep.mubr.f32.mxu0 0.0
      %633 = vmatmul.mubr.f32.gmra.mxu0 %v467
      %v634 = vpop.f32.mrf.mxu0
      %v635 = vadd.f32 %v541, %v634
      %v636 = vpop.f32.mrf.mxu0
      %637 = vmatprep.mubr.f32.mxu0 0.0
      %638 = vmatmul.mubr.f32.gmra.mxu0 %v472
      %v639 = vpop.f32.mrf.mxu0
      %v640 = vadd.f32 %v541, %v639
      %v641 = vpop.f32.mrf.mxu0
      %642 = vmatprep.mubr.f32.mxu0 0.0
      %643 = vmatmul.mubr.f32.gmra.mxu0 %v477
      %v644 = vpop.f32.mrf.mxu0
      %v645 = vadd.f32 %v541, %v644
      %v646 = vpop.f32.mrf.mxu0
      %647 = vmatprep.mubr.f32.mxu0 0.0
      %648 = vmatmul.mubr.f32.gmra.mxu0 %v482
      %v649 = vpop.f32.mrf.mxu0
      %v650 = vadd.f32 %v541, %v649
      %v651 = vpop.f32.mrf.mxu0
      %652 = vmatprep.mubr.f32.mxu0 0.0
      %653 = vmatmul.mubr.f32.gmra.mxu0 %v487
      %v654 = vpop.f32.mrf.mxu0
      %v655 = vadd.f32 %v541, %v654
      %v656 = vpop.f32.mrf.mxu0
      %657 = vmatprep.mubr.f32.mxu0 0.0
      %658 = vmatmul.mubr.f32.gmra.mxu0 %v492
      %v659 = vpop.f32.mrf.mxu0
      %v660 = vadd.f32 %v541, %v659
      %v661 = vpop.f32.mrf.mxu0
      %662 = vmatprep.mubr.f32.mxu0 0.0
      %663 = vmatmul.mubr.f32.gmra.mxu0 %v497
      %v664 = vpop.f32.mrf.mxu0
      %v665 = vadd.f32 %v541, %v664
      %v666 = vpop.f32.mrf.mxu0
      %667 = vmatprep.mubr.f32.mxu0 0.0
      %668 = vmatmul.mubr.f32.gmra.mxu0 %v502
      %v669 = vpop.f32.mrf.mxu0
      %v670 = vadd.f32 %v541, %v669
      %v671 = vpop.f32.mrf.mxu0
      %672 = vmatprep.mubr.f32.mxu0 0.0
      %673 = vmatmul.mubr.f32.gmra.mxu0 %v507
      %v674 = vpop.f32.mrf.mxu0
      %v675 = vadd.f32 %v541, %v674
      %v676 = vpop.f32.mrf.mxu0
      %677 = vmatprep.mubr.f32.mxu0 0.0
      %678 = vmatmul.mubr.f32.gmra.mxu0 %v512
      %v679 = vpop.f32.mrf.mxu0
      %v680 = vadd.f32 %v541, %v679
      %v681 = vpop.f32.mrf.mxu0
      %682 = vmatprep.mubr.f32.mxu0 0.0
      %683 = vmatmul.mubr.f32.gmra.mxu0 %v517
      %v684 = vpop.f32.mrf.mxu0
      %v685 = vadd.f32 %v541, %v684
      %v686 = vpop.f32.mrf.mxu0
      %687 = vdwg.mxu0
      %v688 = vmax.f32 %v610, 0.0
      %v689 = vmax.f32 %v615, 0.0
      %v690 = vmax.f32 %v620, 0.0
      %v691 = vmax.f32 %v625, 0.0
      %v692 = vmax.f32 %v630, 0.0
      %v693 = vmax.f32 %v635, 0.0
      %v694 = vmax.f32 %v640, 0.0
      %v695 = vmax.f32 %v645, 0.0
      %v696 = vmax.f32 %v650, 0.0
      %v697 = vmax.f32 %v655, 0.0
      %v698 = vmax.f32 %v660, 0.0
      %v699 = vmax.f32 %v665, 0.0
      %v700 = vmax.f32 %v670, 0.0
      %v701 = vmax.f32 %v675, 0.0
      %v702 = vmax.f32 %v680, 0.0
      %v703 = vmax.f32 %v685, 0.0
      %v704 = vld [vmem:[%s5] sm:$0xff]
      %v705 = vld [vmem:[%s5 + $0x8] sm:$0xff]
      %v706 = vld [vmem:[%s5 + $0x10] sm:$0xff]
      %v707 = vld [vmem:[%s5 + $0x18] sm:$0xff]
      %v708 = vld [vmem:[%s5 + $0x20] sm:$0xff]
      %v709 = vld [vmem:[%s5 + $0x28] sm:$0xff]
      %v710 = vld [vmem:[%s5 + $0x30] sm:$0xff]
      %v711 = vld [vmem:[%s5 + $0x38] sm:$0xff]
      %v712 = vld [vmem:[%s5 + $0x40] sm:$0xff]
      %v713 = vld [vmem:[%s5 + $0x48] sm:$0xff]
      %v714 = vld [vmem:[%s5 + $0x50] sm:$0xff]
      %v715 = vld [vmem:[%s5 + $0x58] sm:$0xff]
      %v716 = vld [vmem:[%s5 + $0x60] sm:$0xff]
      %v717 = vld [vmem:[%s5 + $0x68] sm:$0xff]
      %v718 = vld [vmem:[%s5 + $0x70] sm:$0xff]
      %v719 = vld [vmem:[%s5 + $0x78] sm:$0xff]
      %v720 = vld [vmem:[%s6] sm:$0x1]
      %v722 = vlaneseq
      %v723 = vshrl.u32 %v722, 7
      %v724 = vsub.s32 0, %v723
      %v725 = vrot.slane %v720, %v724
      %727 = vmatprep.subr.mxu0 0.0
      %728 = vmatpush1.msra.mxu0 %v719
      %729 = vmatprep.subr.mxu0 0.0
      %730 = vmatpush1.msra.mxu0 %v718
      %731 = vmatprep.subr.mxu0 0.0
      %732 = vmatpush1.msra.mxu0 %v717
      %733 = vmatprep.subr.mxu0 0.0
      %734 = vmatpush1.msra.mxu0 %v716
      %735 = vmatprep.subr.mxu0 0.0
      %736 = vmatpush1.msra.mxu0 %v715
      %737 = vmatprep.subr.mxu0 0.0
      %738 = vmatpush1.msra.mxu0 %v714
      %739 = vmatprep.subr.mxu0 0.0
      %740 = vmatpush1.msra.mxu0 %v713
      %741 = vmatprep.subr.mxu0 0.0
      %742 = vmatpush1.msra.mxu0 %v712
      %743 = vmatprep.subr.mxu0 0.0
      %744 = vmatpush1.msra.mxu0 %v711
      %745 = vmatprep.subr.mxu0 0.0
      %746 = vmatpush1.msra.mxu0 %v710
      %747 = vmatprep.subr.mxu0 0.0
      %748 = vmatpush1.msra.mxu0 %v709
      %749 = vmatprep.subr.mxu0 0.0
      %750 = vmatpush1.msra.mxu0 %v708
      %751 = vmatprep.subr.mxu0 0.0
      %752 = vmatpush1.msra.mxu0 %v707
      %753 = vmatprep.subr.mxu0 0.0
      %754 = vmatpush1.msra.mxu0 %v706
      %755 = vmatprep.subr.mxu0 0.0
      %756 = vmatpush1.msra.mxu0 %v705
      %757 = vmatprep.subr.mxu0 0.0
      %758 = vmatpush1.msra.mxu0 %v704
      %759 = vmatprep.subr.mxu0 0.0
      %760 = vmatpush2.msra.mxu0 0.0
      %761 = vmatprep.subr.mxu0 0.0
      %762 = vmatpush2.msra.mxu0 0.0
      %763 = vmatprep.subr.mxu0 0.0
      %764 = vmatpush2.msra.mxu0 0.0
      %765 = vmatprep.subr.mxu0 0.0
      %766 = vmatpush2.msra.mxu0 0.0
      %767 = vmatprep.subr.mxu0 0.0
      %768 = vmatpush2.msra.mxu0 0.0
      %769 = vmatprep.subr.mxu0 0.0
      %770 = vmatpush2.msra.mxu0 0.0
      %771 = vmatprep.subr.mxu0 0.0
      %772 = vmatpush2.msra.mxu0 0.0
      %773 = vmatprep.subr.mxu0 0.0
      %774 = vmatpush2.msra.mxu0 0.0
      %775 = vmatprep.subr.mxu0 0.0
      %776 = vmatpush2.msra.mxu0 0.0
      %777 = vmatprep.subr.mxu0 0.0
      %778 = vmatpush2.msra.mxu0 0.0
      %779 = vmatprep.subr.mxu0 0.0
      %780 = vmatpush2.msra.mxu0 0.0
      %781 = vmatprep.subr.mxu0 0.0
      %782 = vmatpush2.msra.mxu0 0.0
      %783 = vmatprep.subr.mxu0 0.0
      %784 = vmatpush2.msra.mxu0 0.0
      %785 = vmatprep.subr.mxu0 0.0
      %786 = vmatpush2.msra.mxu0 0.0
      %787 = vmatprep.subr.mxu0 0.0
      %788 = vmatpush2.msra.mxu0 0.0
      %789 = vmatprep.subr.mxu0 0.0
      %790 = vmatpush2.msra.mxu0 0.0
      %791 = vmatprep.mubr.f32.mxu0 0.0
      %792 = vmatmul.mubr.f32.gmra.mxu0 %v688
      %v793 = vpop.f32.mrf.mxu0
      %v794 = vadd.f32 %v725, %v793
      %v795 = vpop.f32.mrf.mxu0
      %796 = vmatprep.mubr.f32.mxu0 0.0
      %797 = vmatmul.mubr.f32.gmra.mxu0 %v689
      %v798 = vpop.f32.mrf.mxu0
      %v799 = vadd.f32 %v725, %v798
      %v800 = vpop.f32.mrf.mxu0
      %801 = vmatprep.mubr.f32.mxu0 0.0
      %802 = vmatmul.mubr.f32.gmra.mxu0 %v690
      %v803 = vpop.f32.mrf.mxu0
      %v804 = vadd.f32 %v725, %v803
      %v805 = vpop.f32.mrf.mxu0
      %806 = vmatprep.mubr.f32.mxu0 0.0
      %807 = vmatmul.mubr.f32.gmra.mxu0 %v691
      %v808 = vpop.f32.mrf.mxu0
      %v809 = vadd.f32 %v725, %v808
      %v810 = vpop.f32.mrf.mxu0
      %811 = vmatprep.mubr.f32.mxu0 0.0
      %812 = vmatmul.mubr.f32.gmra.mxu0 %v692
      %v813 = vpop.f32.mrf.mxu0
      %v814 = vadd.f32 %v725, %v813
      %v815 = vpop.f32.mrf.mxu0
      %816 = vmatprep.mubr.f32.mxu0 0.0
      %817 = vmatmul.mubr.f32.gmra.mxu0 %v693
      %v818 = vpop.f32.mrf.mxu0
      %v819 = vadd.f32 %v725, %v818
      %v820 = vpop.f32.mrf.mxu0
      %821 = vmatprep.mubr.f32.mxu0 0.0
      %822 = vmatmul.mubr.f32.gmra.mxu0 %v694
      %v823 = vpop.f32.mrf.mxu0
      %v824 = vadd.f32 %v725, %v823
      %v825 = vpop.f32.mrf.mxu0
      %826 = vmatprep.mubr.f32.mxu0 0.0
      %827 = vmatmul.mubr.f32.gmra.mxu0 %v695
      %v828 = vpop.f32.mrf.mxu0
      %v829 = vadd.f32 %v725, %v828
      %v830 = vpop.f32.mrf.mxu0
      %831 = vmatprep.mubr.f32.mxu0 0.0
      %832 = vmatmul.mubr.f32.gmra.mxu0 %v696
      %v833 = vpop.f32.mrf.mxu0
      %v834 = vadd.f32 %v725, %v833
      %v835 = vpop.f32.mrf.mxu0
      %836 = vmatprep.mubr.f32.mxu0 0.0
      %837 = vmatmul.mubr.f32.gmra.mxu0 %v697
      %v838 = vpop.f32.mrf.mxu0
      %v839 = vadd.f32 %v725, %v838
      %v840 = vpop.f32.mrf.mxu0
      %841 = vmatprep.mubr.f32.mxu0 0.0
      %842 = vmatmul.mubr.f32.gmra.mxu0 %v698
      %v843 = vpop.f32.mrf.mxu0
      %v844 = vadd.f32 %v725, %v843
      %v845 = vpop.f32.mrf.mxu0
      %846 = vmatprep.mubr.f32.mxu0 0.0
      %847 = vmatmul.mubr.f32.gmra.mxu0 %v699
      %v848 = vpop.f32.mrf.mxu0
      %v849 = vadd.f32 %v725, %v848
      %v850 = vpop.f32.mrf.mxu0
      %851 = vmatprep.mubr.f32.mxu0 0.0
      %852 = vmatmul.mubr.f32.gmra.mxu0 %v700
      %v853 = vpop.f32.mrf.mxu0
      %v854 = vadd.f32 %v725, %v853
      %v855 = vpop.f32.mrf.mxu0
      %856 = vmatprep.mubr.f32.mxu0 0.0
      %857 = vmatmul.mubr.f32.gmra.mxu0 %v701
      %v858 = vpop.f32.mrf.mxu0
      %v859 = vadd.f32 %v725, %v858
      %v860 = vpop.f32.mrf.mxu0
      %861 = vmatprep.mubr.f32.mxu0 0.0
      %862 = vmatmul.mubr.f32.gmra.mxu0 %v702
      %v863 = vpop.f32.mrf.mxu0
      %v864 = vadd.f32 %v725, %v863
      %v865 = vpop.f32.mrf.mxu0
      %866 = vmatprep.mubr.f32.mxu0 0.0
      %867 = vmatmul.mubr.f32.gmra.mxu0 %v703
      %v868 = vpop.f32.mrf.mxu0
      %v869 = vadd.f32 %v725, %v868
      %v870 = vpop.f32.mrf.mxu0
      %871 = vdwg.mxu0
      %v872 = vmax.f32 %v794, 0.0
      %v873 = vmax.f32 %v799, 0.0
      %v874 = vmax.f32 %v804, 0.0
      %v875 = vmax.f32 %v809, 0.0
      %v876 = vmax.f32 %v814, 0.0
      %v877 = vmax.f32 %v819, 0.0
      %v878 = vmax.f32 %v824, 0.0
      %v879 = vmax.f32 %v829, 0.0
      %v880 = vmax.f32 %v834, 0.0
      %v881 = vmax.f32 %v839, 0.0
      %v882 = vmax.f32 %v844, 0.0
      %v883 = vmax.f32 %v849, 0.0
      %v884 = vmax.f32 %v854, 0.0
      %v885 = vmax.f32 %v859, 0.0
      %v886 = vmax.f32 %v864, 0.0
      %v887 = vmax.f32 %v869, 0.0
      %v888 = vld [vmem:[%s7] sm:$0xff]
      %v889 = vld [vmem:[%s7 + $0x8] sm:$0xff]
      %v890 = vld [vmem:[%s7 + $0x10] sm:$0xff]
      %v891 = vld [vmem:[%s7 + $0x18] sm:$0xff]
      %v892 = vld [vmem:[%s7 + $0x20] sm:$0xff]
      %v893 = vld [vmem:[%s7 + $0x28] sm:$0xff]
      %v894 = vld [vmem:[%s7 + $0x30] sm:$0xff]
      %v895 = vld [vmem:[%s7 + $0x38] sm:$0xff]
      %v896 = vld [vmem:[%s7 + $0x40] sm:$0xff]
      %v897 = vld [vmem:[%s7 + $0x48] sm:$0xff]
      %v898 = vld [vmem:[%s7 + $0x50] sm:$0xff]
      %v899 = vld [vmem:[%s7 + $0x58] sm:$0xff]
      %v900 = vld [vmem:[%s7 + $0x60] sm:$0xff]
      %v901 = vld [vmem:[%s7 + $0x68] sm:$0xff]
      %v902 = vld [vmem:[%s7 + $0x70] sm:$0xff]
      %v903 = vld [vmem:[%s7 + $0x78] sm:$0xff]
      %v904 = vld [vmem:[%s8] sm:$0x1]
      %v906 = vlaneseq
      %v907 = vshrl.u32 %v906, 7
      %v908 = vsub.s32 0, %v907
      %v909 = vrot.slane %v904, %v908
      %911 = vmatprep.subr.mxu0 0.0
      %912 = vmatpush1.msra.mxu0 %v903
      %913 = vmatprep.subr.mxu0 0.0
      %914 = vmatpush1.msra.mxu0 %v902
      %915 = vmatprep.subr.mxu0 0.0
      %916 = vmatpush1.msra.mxu0 %v901
      %917 = vmatprep.subr.mxu0 0.0
      %918 = vmatpush1.msra.mxu0 %v900
      %919 = vmatprep.subr.mxu0 0.0
      %920 = vmatpush1.msra.mxu0 %v899
      %921 = vmatprep.subr.mxu0 0.0
      %922 = vmatpush1.msra.mxu0 %v898
      %923 = vmatprep.subr.mxu0 0.0
      %924 = vmatpush1.msra.mxu0 %v897
      %925 = vmatprep.subr.mxu0 0.0
      %926 = vmatpush1.msra.mxu0 %v896
      %927 = vmatprep.subr.mxu0 0.0
      %928 = vmatpush1.msra.mxu0 %v895
      %929 = vmatprep.subr.mxu0 0.0
      %930 = vmatpush1.msra.mxu0 %v894
      %931 = vmatprep.subr.mxu0 0.0
      %932 = vmatpush1.msra.mxu0 %v893
      %933 = vmatprep.subr.mxu0 0.0
      %934 = vmatpush1.msra.mxu0 %v892
      %935 = vmatprep.subr.mxu0 0.0
      %936 = vmatpush1.msra.mxu0 %v891
      %937 = vmatprep.subr.mxu0 0.0
      %938 = vmatpush1.msra.mxu0 %v890
      %939 = vmatprep.subr.mxu0 0.0
      %940 = vmatpush1.msra.mxu0 %v889
      %941 = vmatprep.subr.mxu0 0.0
      %942 = vmatpush1.msra.mxu0 %v888
      %943 = vmatprep.subr.mxu0 0.0
      %944 = vmatpush2.msra.mxu0 0.0
      %945 = vmatprep.subr.mxu0 0.0
      %946 = vmatpush2.msra.mxu0 0.0
      %947 = vmatprep.subr.mxu0 0.0
      %948 = vmatpush2.msra.mxu0 0.0
      %949 = vmatprep.subr.mxu0 0.0
      %950 = vmatpush2.msra.mxu0 0.0
      %951 = vmatprep.subr.mxu0 0.0
      %952 = vmatpush2.msra.mxu0 0.0
      %953 = vmatprep.subr.mxu0 0.0
      %954 = vmatpush2.msra.mxu0 0.0
      %955 = vmatprep.subr.mxu0 0.0
      %956 = vmatpush2.msra.mxu0 0.0
      %957 = vmatprep.subr.mxu0 0.0
      %958 = vmatpush2.msra.mxu0 0.0
      %959 = vmatprep.subr.mxu0 0.0
      %960 = vmatpush2.msra.mxu0 0.0
      %961 = vmatprep.subr.mxu0 0.0
      %962 = vmatpush2.msra.mxu0 0.0
      %963 = vmatprep.subr.mxu0 0.0
      %964 = vmatpush2.msra.mxu0 0.0
      %965 = vmatprep.subr.mxu0 0.0
      %966 = vmatpush2.msra.mxu0 0.0
      %967 = vmatprep.subr.mxu0 0.0
      %968 = vmatpush2.msra.mxu0 0.0
      %969 = vmatprep.subr.mxu0 0.0
      %970 = vmatpush2.msra.mxu0 0.0
      %971 = vmatprep.subr.mxu0 0.0
      %972 = vmatpush2.msra.mxu0 0.0
      %973 = vmatprep.subr.mxu0 0.0
      %974 = vmatpush2.msra.mxu0 0.0
      %975 = vmatprep.mubr.f32.mxu0 0.0
      %976 = vmatmul.mubr.f32.gmra.mxu0 %v872
      %v977 = vpop.f32.mrf.mxu0
      %v978 = vadd.f32 %v909, %v977
      %v979 = vpop.f32.mrf.mxu0
      %980 = vmatprep.mubr.f32.mxu0 0.0
      %981 = vmatmul.mubr.f32.gmra.mxu0 %v873
      %v982 = vpop.f32.mrf.mxu0
      %v983 = vadd.f32 %v909, %v982
      %v984 = vpop.f32.mrf.mxu0
      %985 = vmatprep.mubr.f32.mxu0 0.0
      %986 = vmatmul.mubr.f32.gmra.mxu0 %v874
      %v987 = vpop.f32.mrf.mxu0
      %v988 = vadd.f32 %v909, %v987
      %v989 = vpop.f32.mrf.mxu0
      %990 = vmatprep.mubr.f32.mxu0 0.0
      %991 = vmatmul.mubr.f32.gmra.mxu0 %v875
      %v992 = vpop.f32.mrf.mxu0
      %v993 = vadd.f32 %v909, %v992
      %v994 = vpop.f32.mrf.mxu0
      %995 = vmatprep.mubr.f32.mxu0 0.0
      %996 = vmatmul.mubr.f32.gmra.mxu0 %v876
      %v997 = vpop.f32.mrf.mxu0
      %v998 = vadd.f32 %v909, %v997
      %v999 = vpop.f32.mrf.mxu0
      %1000 = vmatprep.mubr.f32.mxu0 0.0
      %1001 = vmatmul.mubr.f32.gmra.mxu0 %v877
      %v1002 = vpop.f32.mrf.mxu0
      %v1003 = vadd.f32 %v909, %v1002
      %v1004 = vpop.f32.mrf.mxu0
      %1005 = vmatprep.mubr.f32.mxu0 0.0
      %1006 = vmatmul.mubr.f32.gmra.mxu0 %v878
      %v1007 = vpop.f32.mrf.mxu0
      %v1008 = vadd.f32 %v909, %v1007
      %v1009 = vpop.f32.mrf.mxu0
      %1010 = vmatprep.mubr.f32.mxu0 0.0
      %1011 = vmatmul.mubr.f32.gmra.mxu0 %v879
      %v1012 = vpop.f32.mrf.mxu0
      %v1013 = vadd.f32 %v909, %v1012
      %v1014 = vpop.f32.mrf.mxu0
      %1015 = vmatprep.mubr.f32.mxu0 0.0
      %1016 = vmatmul.mubr.f32.gmra.mxu0 %v880
      %v1017 = vpop.f32.mrf.mxu0
      %v1018 = vadd.f32 %v909, %v1017
      %v1019 = vpop.f32.mrf.mxu0
      %1020 = vmatprep.mubr.f32.mxu0 0.0
      %1021 = vmatmul.mubr.f32.gmra.mxu0 %v881
      %v1022 = vpop.f32.mrf.mxu0
      %v1023 = vadd.f32 %v909, %v1022
      %v1024 = vpop.f32.mrf.mxu0
      %1025 = vmatprep.mubr.f32.mxu0 0.0
      %1026 = vmatmul.mubr.f32.gmra.mxu0 %v882
      %v1027 = vpop.f32.mrf.mxu0
      %v1028 = vadd.f32 %v909, %v1027
      %v1029 = vpop.f32.mrf.mxu0
      %1030 = vmatprep.mubr.f32.mxu0 0.0
      %1031 = vmatmul.mubr.f32.gmra.mxu0 %v883
      %v1032 = vpop.f32.mrf.mxu0
      %v1033 = vadd.f32 %v909, %v1032
      %v1034 = vpop.f32.mrf.mxu0
      %1035 = vmatprep.mubr.f32.mxu0 0.0
      %1036 = vmatmul.mubr.f32.gmra.mxu0 %v884
      %v1037 = vpop.f32.mrf.mxu0
      %v1038 = vadd.f32 %v909, %v1037
      %v1039 = vpop.f32.mrf.mxu0
      %1040 = vmatprep.mubr.f32.mxu0 0.0
      %1041 = vmatmul.mubr.f32.gmra.mxu0 %v885
      %v1042 = vpop.f32.mrf.mxu0
      %v1043 = vadd.f32 %v909, %v1042
      %v1044 = vpop.f32.mrf.mxu0
      %1045 = vmatprep.mubr.f32.mxu0 0.0
      %1046 = vmatmul.mubr.f32.gmra.mxu0 %v886
      %v1047 = vpop.f32.mrf.mxu0
      %v1048 = vadd.f32 %v909, %v1047
      %v1049 = vpop.f32.mrf.mxu0
      %1050 = vmatprep.mubr.f32.mxu0 0.0
      %1051 = vmatmul.mubr.f32.gmra.mxu0 %v887
      %v1052 = vpop.f32.mrf.mxu0
      %v1053 = vadd.f32 %v909, %v1052
      %v1054 = vpop.f32.mrf.mxu0
      %1055 = vdwg.mxu0
      %1056 = vst [vmem:[%s334] sm:$0xff] %v978
      %1057 = vst [vmem:[%s334 + $0x8] sm:$0xff] %v983
      %1058 = vst [vmem:[%s334 + $0x10] sm:$0xff] %v988
      %1059 = vst [vmem:[%s334 + $0x18] sm:$0xff] %v993
      %1060 = vst [vmem:[%s334 + $0x20] sm:$0xff] %v998
      %1061 = vst [vmem:[%s334 + $0x28] sm:$0xff] %v1003
      %1062 = vst [vmem:[%s334 + $0x30] sm:$0xff] %v1008
      %1063 = vst [vmem:[%s334 + $0x38] sm:$0xff] %v1013
      %1064 = vst [vmem:[%s334 + $0x40] sm:$0xff] %v1018
      %1065 = vst [vmem:[%s334 + $0x48] sm:$0xff] %v1023
      %1066 = vst [vmem:[%s334 + $0x50] sm:$0xff] %v1028
      %1067 = vst [vmem:[%s334 + $0x58] sm:$0xff] %v1033
      %1068 = vst [vmem:[%s334 + $0x60] sm:$0xff] %v1038
      %1069 = vst [vmem:[%s334 + $0x68] sm:$0xff] %v1043
      %1070 = vst [vmem:[%s334 + $0x70] sm:$0xff] %v1048
      %1071 = vst [vmem:[%s334 + $0x78] sm:$0xff] %v1053
      %s1072 = smul.u32 16, %s20
      %p1073 = scmp.lt.s32.totalorder %s1072, 31
      %s1074 = scalar_select %p1073, %s1072, 31
      %s1075 = smul.addr %s1074, 8
      %s1076 = scalar_lea.vmem %s9, %s1075
      // Predicated region
      $region57: #{_mlp_forward_impl.1} parent=55 // pred_check
        %p1077 = pneg %p232
      $region58: #{_mlp_forward_impl.1} parent=55 // pred_check_branch
        %1079 = sbr.rel (%p1077) target = $region60
      $region59: #{_mlp_forward_impl.1} parent=55 // pred_region
        %s1080 = smul.u32 16, %s20
      $region60: #{_mlp_forward_impl.1} parent=55 // pred_fallthru
        _
    $region56: #{_mlp_forward_impl.1} parent=5 // pred_fallthru
      _
    %p1081 = scmp.le.s32.totalorder 2, %s15
    // Predicated region
    $region61: #{_mlp_forward_impl.1} parent=5 // pred_check
      %p1082 = pneg %p1081
    $region62: #{_mlp_forward_impl.1} parent=5 // pred_check_branch
      %1084 = sbr.rel (%p1082) target = $region64
    $region63: #{_mlp_forward_impl.1} parent=5 // pred_region
      %s1085 = ssub.s32 %s15, 2
      // Predicated region
      $region65: #{_mlp_forward_impl.1} parent=63 // pred_check
        %p1086 = pneg %p238
      $region66: #{_mlp_forward_impl.1} parent=63 // pred_check_branch
        %1088 = sbr.rel (%p1086) target = $region68
      $region67: #{_mlp_forward_impl.1} parent=63 // pred_region
        %s1089 = smul.u32 16, %s21
        %p1090 = scmp.lt.s32.totalorder %s1089, 31
        %s1091 = scalar_select %p1090, %s1089, 31
        %s1092 = smul.addr %s1091, 8
        %s1093 = scalar_lea.vmem %s9, %s1092
      $region68: #{_mlp_forward_impl.1} parent=63 // pred_fallthru
        _
    $region64: #{_mlp_forward_impl.1} parent=5 // pred_fallthru
      _
  $region6: #{_mlp_forward_impl.1} parent=0 // loop_footer
    %s19 = sadd.s32 1, %s15
  $region7: #{_mlp_forward_impl.1} parent=0 // loop_footer_branch
    %14 = sbr.rel target = $region3
  $region8: #{_mlp_forward_impl.1} parent=0 // loop_exit
    _

</llo_original>
